<compile_context>
chip_gen: v7x
topology: tpu7x:2x2x1
jax: 0.10.0
libtpu: 0.0.40
codegen_flags: <defaults>
</compile_context>

<pallas_src>
import functools

import jax
import jax.numpy as jnp
from jax import lax
from jax.experimental import pallas as pl
from jax.experimental.pallas import tpu as pltpu

_MIB = 1 << 20


def _round_up(x, m):
    return (x + m - 1) // m * m


def _sublane_min(itemsize):
    # Minimum second-to-last tile dim per dtype packing: f32->8, bf16->16, 8b->32.
    return 32 // itemsize


@functools.lru_cache(maxsize=None)
def _vmem_capacity_bytes():
    # Generation-aware VMEM capacity (v5e/v6e: 128 MiB, v7x: 64 MiB per TC).
    try:
        return int(pltpu.get_tpu_info().vmem_capacity_bytes)
    except Exception:
        return 64 * _MIB  # conservative (v7x-safe) fallback


def _tile_footprint_bytes(tm, tn, tk, in_bytes, out_bytes, multi_k):
    # 2 pipeline buffers per input tile, 2 per output tile; f32 accumulator
    # only when the K axis is actually split across grid steps.
    fp = (2 * tm * tk * in_bytes
          + 2 * tn * tk * in_bytes
          + 2 * tm * tn * out_bytes)
    if multi_k:
        fp += tm * tn * 4
    return fp


def _choose_tiles(M, N, K, in_bytes, out_bytes, budget_bytes):
    """Pick lane-dense, MXU-aligned, VMEM-budgeted tiles."""
    sub = _sublane_min(in_bytes)
    # v6e/v7x MXU is 256x256 -> prefer 256-aligned tn/tk when the problem is
    # big enough; 256 is also a 128-multiple so it stays valid on v5e.
    lane = 256 if (N >= 256 and K >= 256) else 128

    M_r = _round_up(M, sub)
    if M_r <= 64:
        # Decode regime: purely weight-streaming.  tm just covers M; maximize
        # the weight tile (tn x tk) per step to amortize ~0.35 us/step.
        tm = M_r
        tn_cap, tk_cap = 2048, 2048
    else:
        # Prefill/training regime: arithmetic intensity per weight byte ~ tm,
        # so push tm up (weight HBM traffic = (M_pad/tm) * N * K bytes).
        tm = min(M_r, 512)
        tn_cap, tk_cap = 1024, 2048

    tn = min(_round_up(N, lane), tn_cap)
    tk = min(_round_up(K, lane), tk_cap)

    def fits(tm_, tn_, tk_):
        return _tile_footprint_bytes(
            tm_, tn_, tk_, in_bytes, out_bytes, multi_k=True) <= budget_bytes

    # Shrink tk first (only changes #K steps, not total HBM traffic), then tn,
    # and only then tm (shrinking tm directly increases weight re-reads).
    while not fits(tm, tn, tk):
        if tk > lane:
            tk = max(lane, (tk // 2) // 128 * 128)
        elif tn > lane:
            tn = max(lane, (tn // 2) // 128 * 128)
        elif tm > sub:
            tm = max(sub, (tm // 2) // sub * sub)
        else:
            break
    return tm, tn, tk


def _linear_kernel_acc(x_ref, w_ref, o_ref, acc_ref):
    """(tm, tn) output tile accumulated over the K grid axis.

    x: (tm, tk), w: (tn, tk) in native PyTorch [out, in] layout.  The trans-B
    contraction lowers to the MXU's transposed-RHS push on Mosaic (no XLU
    vxpose of the weight tile).
    """
    @pl.when(pl.program_id(2) == 0)
    def _():
        acc_ref[...] = jnp.zeros_like(acc_ref)

    acc_ref[...] += lax.dot_general(
        x_ref[...],
        w_ref[...],
        dimension_numbers=(((1,), (1,)), ((), ())),
        preferred_element_type=jnp.float32,
    )

    @pl.when(pl.program_id(2) == pl.num_programs(2) - 1)
    def _():
        o_ref[...] = acc_ref[...].astype(o_ref.dtype)


def _linear_kernel_single(x_ref, w_ref, o_ref):
    """Single-K-step specialization: no accumulator scratch, no branches."""
    o_ref[...] = lax.dot_general(
        x_ref[...],
        w_ref[...],
        dimension_numbers=(((1,), (1,)), ((), ())),
        preferred_element_type=jnp.float32,
    ).astype(o_ref.dtype)


@functools.partial(
    jax.jit, static_argnames=("tm", "tn", "tk", "compute_dtype", "out_dtype"))
def output_head_forward(x, weight, *, tm=None, tn=None, tk=None,
                        compute_dtype=None, out_dtype=None):
    """y = x @ weight.T  (nn.Linear with bias=False).

    x:             [..., in_features]
    weight:        [out_features, in_features]   (PyTorch layout, untouched)
    compute_dtype: optional streaming dtype (e.g. jnp.bfloat16); MXU still
                   accumulates in f32.  For a static weight, pre-cast it once
                   outside this call so no per-call N x K copy is emitted.
    out_dtype:     optional logits dtype (e.g. bf16 to halve output HBM bytes).
    returns        [..., out_features]
    """
    *lead, in_features = x.shape
    out_features, k_w = weight.shape
    if k_w != in_features:
        raise ValueError(f"weight K {k_w} != x K {in_features}")

    out_dtype = x.dtype if out_dtype is None else jnp.dtype(out_dtype)

    M = 1
    for d in lead:
        M *= d
    x2d = x.reshape(M, in_features)
    w2d = weight  # [N, K] -- no transpose / relayout of the vocab-sized weight.

    if compute_dtype is not None:
        compute_dtype = jnp.dtype(compute_dtype)
        if x2d.dtype != compute_dtype:
            x2d = x2d.astype(compute_dtype)
        if w2d.dtype != compute_dtype:
            # No-op (no HBM copy) when the caller pre-cast the weight.
            w2d = w2d.astype(compute_dtype)

    in_bytes = jnp.dtype(x2d.dtype).itemsize
    out_bytes = jnp.dtype(out_dtype).itemsize
    sub = _sublane_min(in_bytes)

    vmem_cap = _vmem_capacity_bytes()
    # ~28 MiB tile budget on v7x (64 MiB VMEM); ~60 MiB on v5e/v6e (128 MiB).
    budget = max(16 * _MIB, vmem_cap // 2 - 4 * _MIB)

    auto_tm, auto_tn, auto_tk = _choose_tiles(
        M, out_features, in_features, in_bytes, out_bytes, budget)
    tm = auto_tm if tm is None else tm
    tn = auto_tn if tn is None else tn
    tk = auto_tk if tk is None else tk

    # Validate tiles against (sublane, lane) / dtype-packing constraints.
    if tm % sub or tn % 128 or tk % 128:
        raise ValueError(
            f"tiles (tm={tm}, tn={tn}, tk={tk}) must satisfy tm%{sub}==0, "
            f"tn%128==0, tk%128==0 for dtype {jnp.dtype(x2d.dtype).name}")

    M_pad = _round_up(M, tm)
    N_pad = _round_up(out_features, tn)
    K_pad = _round_up(in_features, tk)

    # Pad only when a dim does not already divide the tile (hidden / vocab are
    # usually 128/256 multiples -> no weight copy for production shapes).
    if (M_pad, K_pad) != (M, in_features):
        x2d = jnp.pad(x2d, ((0, M_pad - M), (0, K_pad - in_features)))
    if (N_pad, K_pad) != (out_features, in_features):
        w2d = jnp.pad(w2d, ((0, N_pad - out_features),
                            (0, K_pad - in_features)))

    grid_m = M_pad // tm
    grid_n = N_pad // tn
    k_steps = K_pad // tk

    footprint = _tile_footprint_bytes(tm, tn, tk, in_bytes, out_bytes,
                                      multi_k=(k_steps > 1))
    # Scoped-VMEM ceiling with headroom for compiler-internal scratch:
    # <= 48 MiB on v7x, <= 96 MiB on v5e/v6e.
    vmem_limit = int(min(footprint + 16 * _MIB, vmem_cap * 3 // 4))

    cost = pl.CostEstimate(
        flops=2 * M_pad * N_pad * K_pad,
        transcendentals=0,
        bytes_accessed=(
            grid_n * M_pad * K_pad * in_bytes      # x re-read per N block
            + grid_m * N_pad * K_pad * in_bytes    # weight re-read per M block
            + M_pad * N_pad * out_bytes            # logits write
        ),
    )

    if k_steps == 1:
        y2d = pl.pallas_call(
            _linear_kernel_single,
            out_shape=jax.ShapeDtypeStruct((M_pad, N_pad), out_dtype),
            grid_spec=pltpu.PrefetchScalarGridSpec(
                num_scalar_prefetch=0,
                grid=(grid_m, grid_n),
                in_specs=[
                    pl.BlockSpec((tm, tk), lambda i, j: (i, 0)),
                    pl.BlockSpec((tn, tk), lambda i, j: (j, 0)),
                ],
                out_specs=pl.BlockSpec((tm, tn), lambda i, j: (i, j)),
            ),
            compiler_params=pltpu.CompilerParams(
                dimension_semantics=("parallel", "parallel"),
                vmem_limit_bytes=vmem_limit,
            ),
            cost_estimate=cost,
        )(x2d, w2d)
    else:
        y2d = pl.pallas_call(
            _linear_kernel_acc,
            out_shape=jax.ShapeDtypeStruct((M_pad, N_pad), out_dtype),
            grid_spec=pltpu.PrefetchScalarGridSpec(
                num_scalar_prefetch=0,
                grid=(grid_m, grid_n, k_steps),
                in_specs=[
                    pl.BlockSpec((tm, tk), lambda i, j, k: (i, k)),
                    pl.BlockSpec((tn, tk), lambda i, j, k: (j, k)),
                ],
                out_specs=pl.BlockSpec((tm, tn), lambda i, j, k: (i, j)),
                scratch_shapes=[pltpu.VMEM((tm, tn), jnp.float32)],
            ),
            compiler_params=pltpu.CompilerParams(
                dimension_semantics=("parallel", "parallel", "arbitrary"),
                vmem_limit_bytes=vmem_limit,
            ),
            cost_estimate=cost,
        )(x2d, w2d)

    # Slice only the axes that were actually padded (avoids an M x N HBM
    # round-trip in the common exactly-divisible case).
    if N_pad != out_features:
        y2d = y2d[:, :out_features]
    if M_pad != M:
        y2d = y2d[:M]
    return y2d.reshape(*lead, out_features)


if __name__ == "__main__":
    # TODO(synk): tp_group (tensor-parallel sharding) has no single-device
    # Pallas equivalent; this kernel computes the full (local) linear.

    # Small shapes consistent with the module: batch=2, seq=8, hidden=32 -> 64.
    batch, seq, in_features, out_features = 2, 8, 32, 64

    key = jax.random.PRNGKey(0)
    kx, kw = jax.random.split(key)
    x = jax.random.normal(kx, (batch, seq, in_features), dtype=jnp.float32)
    weight = (jax.random.normal(kw, (out_features, in_features),
                                dtype=jnp.float32) * 0.02)
    y_ref = x @ weight.T

    # Full-precision path (single-K-step specialized kernel).
    y = jax.block_until_ready(output_head_forward(x, weight))
    assert y.shape == (batch, seq, out_features)
    assert jnp.allclose(y, y_ref, atol=1e-5, rtol=1e-5)

    # bf16-streaming path (production config for the bandwidth-bound head).
    y_bf16 = jax.block_until_ready(
        output_head_forward(x, weight, compute_dtype=jnp.bfloat16))
    assert y_bf16.shape == (batch, seq, out_features)
    assert jnp.allclose(y_bf16, y_ref, atol=5e-2, rtol=5e-2)

    # Multi-K-step accumulator path (exercised with a slightly larger hidden).
    k2, n2 = 384, 256
    kx2, kw2 = jax.random.split(jax.random.PRNGKey(0))
    x2 = jax.random.normal(kx2, (batch, seq, k2), dtype=jnp.float32)
    w2 = jax.random.normal(kw2, (n2, k2), dtype=jnp.float32) * 0.02
    y2 = jax.block_until_ready(
        output_head_forward(x2, w2, tm=16, tn=128, tk=128))
    assert jnp.allclose(y2, x2 @ w2.T, atol=1e-4, rtol=1e-4)

    print("KERNEL_OK")
</pallas_src>

<mosaic_0001>
module attributes {stable_mosaic.version = 11 : i64} {
  func.func @_linear_kernel_single(%arg0: i32, %arg1: i32, %arg2: memref<16x128xf32, #tpu.memory_space<vmem>>, %arg3: memref<128x128xf32, #tpu.memory_space<vmem>>, %arg4: memref<16x128xf32, #tpu.memory_space<vmem>>) attributes {dimension_semantics = [#tpu.dimension_semantics<parallel>, #tpu.dimension_semantics<parallel>], iteration_bounds = array<i64: 1, 1>, scalar_prefetch = 0 : i64, scratch_operands = 0 : i64, tpu.core_type = #tpu.core_type<tc>, window_params = [{transform_indices = @transform_0, window_bounds = array<i64: 16, 128>}, {transform_indices = @transform_1, window_bounds = array<i64: 128, 128>}, {transform_indices = @transform_2, window_bounds = array<i64: 16, 128>}]} {
    %c0 = arith.constant 0 : index
    %c0_0 = arith.constant 0 : index
    %0 = vector.load %arg2[%c0, %c0_0] : memref<16x128xf32, #tpu.memory_space<vmem>>, vector<16x128xf32>
    %c0_1 = arith.constant 0 : index
    %c0_2 = arith.constant 0 : index
    %1 = vector.load %arg3[%c0_1, %c0_2] : memref<128x128xf32, #tpu.memory_space<vmem>>, vector<128x128xf32>
    %cst = arith.constant dense<0.000000e+00> : vector<16x128xf32>
    %2 = tpu.matmul %0, %1, %cst {dimension_numbers = #tpu.dot_dimension_numbers<[1], [1], [0], [0], [0, 0, 1, 0], [], []>} : vector<16x128xf32>, vector<128x128xf32>, vector<16x128xf32> -> vector<16x128xf32>
    %c0_3 = arith.constant 0 : index
    %c0_4 = arith.constant 0 : index
    %3 = vector.load %arg4[%c0_3, %c0_4] : memref<16x128xf32, #tpu.memory_space<vmem>>, vector<16x128xf32>
    tpu.vector_store %arg4[%c0_3, %c0_4], %2 {strides = array<i32>} : memref<16x128xf32, #tpu.memory_space<vmem>>, vector<16x128xf32>,
    return
  }
  func.func @transform_0(%arg0: i32, %arg1: i32) -> (i32, i32) {
    %c0_i32 = arith.constant 0 : i32
    %c0_i32_0 = arith.constant 0 : i32
    return %arg0, %c0_i32 : i32, i32
  }
  func.func @transform_1(%arg0: i32, %arg1: i32) -> (i32, i32) {
    %c0_i32 = arith.constant 0 : i32
    %c0_i32_0 = arith.constant 0 : i32
    return %arg1, %c0_i32 : i32, i32
  }
  func.func @transform_2(%arg0: i32, %arg1: i32) -> (i32, i32) {
    %c0_i32 = arith.constant 0 : i32
    return %arg0, %arg1 : i32, i32
  }
}

</mosaic_0001>

<llo_original>
// kernel: output_head_forward.1
$region0: #{output_head_forward.1}
  #allocation0 [shape = 'u32[]', space=smem, size = 0x4, offset = 0x4, fixed_abs, tag = 'smem constant byte address 0x4 - core index']
  #allocation1 [shape = 'u32[144,128]{1,0:T(1,128)}', space=vmem, size = 0x12000, scoped, tag = 'internal scratch']
  %s0 = inlined_call_operand.vmem [shape: f32[16,128], index: 0, kind: input, shape index: {}]
  %s1 = inlined_call_operand.vmem [shape: f32[128,128], index: 1, kind: input, shape index: {}]
  %s2 = inlined_call_operand.vmem [shape: f32[16,128], index: 2, kind: output, shape index: {}]
  %s3 = sld [smem:[#allocation0]]
  $region18: #{output_head_forward.1} parent=0
    _
  %s5 = ssub.s32 1, %s3
  %s6 = scalar_select 0, %s5, %s3
  // Predicated region
  $region2: #{output_head_forward.1} parent=0 // pred_check
    _
  $region3: #{output_head_forward.1} parent=0 // pred_check_branch
    %8 = sbr.rel (0) target = $region5
  $region4: #{output_head_forward.1} parent=0 // pred_region
    _
  $region5: #{output_head_forward.1} parent=0 // pred_fallthru
    _
  // Predicated region
  $region6: #{output_head_forward.1} parent=0 // pred_check
    _
  $region7: #{output_head_forward.1} parent=0 // pred_check_branch
    %10 = sbr.rel (0) target = $region9
  $region8: #{output_head_forward.1} parent=0 // pred_region
    _
  $region9: #{output_head_forward.1} parent=0 // pred_fallthru
    _
  %v11 = vld [vmem:[%s0] sm:$0xff]
  %v12 = vld [vmem:[%s0 + $0x8] sm:$0xff]
  %v13 = vld [vmem:[%s1] sm:$0xff]
  %v14 = vld [vmem:[%s1 + $0x8] sm:$0xff]
  %v15 = vld [vmem:[%s1 + $0x10] sm:$0xff]
  %v16 = vld [vmem:[%s1 + $0x18] sm:$0xff]
  %v17 = vld [vmem:[%s1 + $0x20] sm:$0xff]
  %v18 = vld [vmem:[%s1 + $0x28] sm:$0xff]
  %v19 = vld [vmem:[%s1 + $0x30] sm:$0xff]
  %v20 = vld [vmem:[%s1 + $0x38] sm:$0xff]
  %v21 = vld [vmem:[%s1 + $0x40] sm:$0xff]
  %v22 = vld [vmem:[%s1 + $0x48] sm:$0xff]
  %v23 = vld [vmem:[%s1 + $0x50] sm:$0xff]
  %v24 = vld [vmem:[%s1 + $0x58] sm:$0xff]
  %v25 = vld [vmem:[%s1 + $0x60] sm:$0xff]
  %v26 = vld [vmem:[%s1 + $0x68] sm:$0xff]
  %v27 = vld [vmem:[%s1 + $0x70] sm:$0xff]
  %v28 = vld [vmem:[%s1 + $0x78] sm:$0xff]
  %29 = vmatprep.subr.mxu0 0.0
  %30 = vmatpush1.xpose.msra.mxu0 %v13
  %31 = vmatprep.subr.mxu0 0.0
  %32 = vmatpush1.xpose.msra.mxu0 %v14
  %33 = vmatprep.subr.mxu0 0.0
  %34 = vmatpush1.xpose.msra.mxu0 %v15
  %35 = vmatprep.subr.mxu0 0.0
  %36 = vmatpush1.xpose.msra.mxu0 %v16
  %37 = vmatprep.subr.mxu0 0.0
  %38 = vmatpush1.xpose.msra.mxu0 %v17
  %39 = vmatprep.subr.mxu0 0.0
  %40 = vmatpush1.xpose.msra.mxu0 %v18
  %41 = vmatprep.subr.mxu0 0.0
  %42 = vmatpush1.xpose.msra.mxu0 %v19
  %43 = vmatprep.subr.mxu0 0.0
  %44 = vmatpush1.xpose.msra.mxu0 %v20
  %45 = vmatprep.subr.mxu0 0.0
  %46 = vmatpush1.xpose.msra.mxu0 %v21
  %47 = vmatprep.subr.mxu0 0.0
  %48 = vmatpush1.xpose.msra.mxu0 %v22
  %49 = vmatprep.subr.mxu0 0.0
  %50 = vmatpush1.xpose.msra.mxu0 %v23
  %51 = vmatprep.subr.mxu0 0.0
  %52 = vmatpush1.xpose.msra.mxu0 %v24
  %53 = vmatprep.subr.mxu0 0.0
  %54 = vmatpush1.xpose.msra.mxu0 %v25
  %55 = vmatprep.subr.mxu0 0.0
  %56 = vmatpush1.xpose.msra.mxu0 %v26
  %57 = vmatprep.subr.mxu0 0.0
  %58 = vmatpush1.xpose.msra.mxu0 %v27
  %59 = vmatprep.subr.mxu0 0.0
  %60 = vmatpush1.xpose.msra.mxu0 %v28
  %61 = vmatprep.subr.mxu0 0.0
  %62 = vmatpush1.xpose.msra.mxu0 0.0
  %63 = vmatprep.subr.mxu0 0.0
  %64 = vmatpush1.xpose.msra.mxu0 0.0
  %65 = vmatprep.subr.mxu0 0.0
  %66 = vmatpush1.xpose.msra.mxu0 0.0
  %67 = vmatprep.subr.mxu0 0.0
  %68 = vmatpush1.xpose.msra.mxu0 0.0
  %69 = vmatprep.subr.mxu0 0.0
  %70 = vmatpush1.xpose.msra.mxu0 0.0
  %71 = vmatprep.subr.mxu0 0.0
  %72 = vmatpush1.xpose.msra.mxu0 0.0
  %73 = vmatprep.subr.mxu0 0.0
  %74 = vmatpush1.xpose.msra.mxu0 0.0
  %75 = vmatprep.subr.mxu0 0.0
  %76 = vmatpush1.xpose.msra.mxu0 0.0
  %77 = vmatprep.subr.mxu0 0.0
  %78 = vmatpush1.xpose.msra.mxu0 0.0
  %79 = vmatprep.subr.mxu0 0.0
  %80 = vmatpush1.xpose.msra.mxu0 0.0
  %81 = vmatprep.subr.mxu0 0.0
  %82 = vmatpush1.xpose.msra.mxu0 0.0
  %83 = vmatprep.subr.mxu0 0.0
  %84 = vmatpush1.xpose.msra.mxu0 0.0
  %85 = vmatprep.subr.mxu0 0.0
  %86 = vmatpush1.xpose.msra.mxu0 0.0
  %87 = vmatprep.subr.mxu0 0.0
  %88 = vmatpush1.xpose.msra.mxu0 0.0
  %89 = vmatprep.subr.mxu0 0.0
  %90 = vmatpush1.xpose.msra.mxu0 0.0
  %91 = vmatprep.subr.mxu0 0.0
  %92 = vmatpush1.xpose.msra.mxu0 0.0
  %93 = vmatprep.mubr.f32.mxu0 0.0
  %94 = vmatmul.mubr.f32.gmra.mrb[0].mxu0 %v11
  %v95 = vpop.f32.mrb[0].mxu0
  %v96 = vadd.f32 0.0, %v95
  %v97 = vpop.f32.mrb[0].mxu0
  %98 = vmatprep.mubr.f32.mxu0 0.0
  %99 = vmatmul.mubr.f32.gmra.mrb[0].mxu0 %v12
  %v100 = vpop.f32.mrb[0].mxu0
  %v101 = vadd.f32 0.0, %v100
  %v102 = vpop.f32.mrb[0].mxu0
  %103 = vdwg.mxu0
  %104 = vst [vmem:[%s2] sm:$0xff] %v96
  %105 = vst [vmem:[%s2 + $0x8] sm:$0xff] %v101
  // Predicated region
  $region10: #{output_head_forward.1} parent=0 // pred_check
    _
  $region11: #{output_head_forward.1} parent=0 // pred_check_branch
    %107 = sbr.rel (0) target = $region13
  $region12: #{output_head_forward.1} parent=0 // pred_region
    _
  $region13: #{output_head_forward.1} parent=0 // pred_fallthru
    _
  // Predicated region
  $region14: #{output_head_forward.1} parent=0 // pred_check
    _
  $region15: #{output_head_forward.1} parent=0 // pred_check_branch
    %109 = sbr.rel (0) target = $region17
  $region16: #{output_head_forward.1} parent=0 // pred_region
    _
  $region17: #{output_head_forward.1} parent=0 // pred_fallthru
    _

</llo_original>
